<compile_context>
chip_gen: v7x
topology: tpu7x:2x2x1
jax: 0.10.0
libtpu: 0.0.40
codegen_flags: <defaults>
</compile_context>

<pallas_src>
import jax
import jax.numpy as jnp
from jax.experimental import pallas as pl
from jax.experimental.pallas import tpu as pltpu

_LANE = 128
_ROW_ALIGN = 32                          # covers f32 (8,128), bf16 (16,128), int8/fp8 (32,128)
_TARGET_BLOCK_BYTES = 4 * 1024 * 1024    # ~4 MiB/block -> 16 MiB double-buffered pipeline
_TARGET_BLOCK_BYTES_1D = 512 * 1024      # conservative blocks for the rare ragged (1-D) path
_SINGLE_BLOCK_BYTES = 512 * 1024         # at/below this a 1-step grid is acceptable (tiny)
_VMEM_LIMIT_BYTES = 32 * 1024 * 1024     # clears v5e's 16 MiB scoped default, fits v7x VMEM


def _mish_kernel(x_ref, o_ref):
    x = x_ref[...].astype(jnp.float32)
    # tanh(softplus(x)) == a / (a + 2) with a = exp(x) * (exp(x) + 2):
    # single EUP transcendental, no catastrophic cancellation for x << 0.
    e = jnp.exp(x)
    a = e * (e + 2.0)
    t = a / (a + 2.0)
    # PyTorch softplus threshold: softplus(x) == x for x > 20 and tanh(x) == 1.0
    # there in f32.  This select also discards Inf/NaN lanes produced by exp
    # overflow (x > ~88), so no jnp.minimum clamp is needed.
    t = jnp.where(x > 20.0, jnp.float32(1.0), t)
    o_ref[...] = (x * t).astype(o_ref.dtype)


def _round_down(v: int, align: int) -> int:
    return max(align, (v // align) * align)


def _pick_block_rows(rows: int, dtype_bytes: int) -> int:
    """Block rows for the 2-D (rows, 128) path."""
    row_bytes = _LANE * dtype_bytes
    if rows * row_bytes <= _SINGLE_BLOCK_BYTES:
        return rows  # tiny slab: single full-extent block (always legal)
    target = _round_down(_TARGET_BLOCK_BYTES // row_bytes, _ROW_ALIGN)
    # Keep >= 4 grid steps: enables DMA/compute overlap and lets the
    # ("parallel",) grid axis shard across v7x's two TensorCores.
    cap = _round_down(rows // 4, _ROW_ALIGN)
    return min(target, cap)


def _pick_block_elems(n: int, dtype_bytes: int) -> int:
    """Block size (elements) for the ragged 1-D path."""
    if n * dtype_bytes <= _SINGLE_BLOCK_BYTES:
        return n  # single full-extent block
    align = _LANE * 8
    target = _round_down(_TARGET_BLOCK_BYTES_1D // dtype_bytes, align)
    cap = _round_down(n // 4, align)
    return min(target, cap)


def _pallas_mish(x_nd: jax.Array, block_shape, index_map, cost_estimate):
    grid = tuple(pl.cdiv(d, b) for d, b in zip(x_nd.shape, block_shape) if b is not None)
    # Only the leading dim is gridded; trailing dims (if any) are full-extent.
    grid = (pl.cdiv(x_nd.shape[0], block_shape[0]),)
    return pl.pallas_call(
        _mish_kernel,
        out_shape=jax.ShapeDtypeStruct(x_nd.shape, x_nd.dtype),
        grid_spec=pltpu.PrefetchScalarGridSpec(
            num_scalar_prefetch=0,
            grid=grid,
            in_specs=[pl.BlockSpec(block_shape, index_map)],
            out_specs=pl.BlockSpec(block_shape, index_map),
        ),
        compiler_params=pltpu.CompilerParams(
            dimension_semantics=("parallel",),
            vmem_limit_bytes=_VMEM_LIMIT_BYTES,
        ),
        cost_estimate=cost_estimate,
    )(x_nd)


def mish(x: jax.Array) -> jax.Array:
    """Elementwise Mish on an arbitrarily-shaped array (NCHW or otherwise)."""
    orig_shape = x.shape
    orig_dtype = x.dtype
    n = x.size
    if n == 0:
        return x

    dtype_bytes = jnp.dtype(orig_dtype).itemsize
    flat = jnp.ravel(x)  # free reshape for default (row-major) layouts
    cost = pl.CostEstimate(
        flops=8 * n, transcendentals=n, bytes_accessed=2 * n * dtype_bytes
    )

    if n % _LANE == 0:
        # Common case: lane-dense (rows, 128) slab, boundary-masked cdiv grid.
        rows = n // _LANE
        x2d = flat.reshape(rows, _LANE)
        block_rows = _pick_block_rows(rows, dtype_bytes)
        out = _pallas_mish(x2d, (block_rows, _LANE), lambda i: (i, 0), cost)
    else:
        # Ragged element count: 1-D BlockSpec; the boundary-masked last block
        # absorbs the tail, so no pad/slice HBM passes are needed.
        # TODO(synk): sweep the 1-D block size if this path ever becomes hot.
        block_elems = _pick_block_elems(n, dtype_bytes)
        out = _pallas_mish(flat, (block_elems,), lambda i: (i,), cost)

    return out.reshape(orig_shape)


def _mish_ref(x: jax.Array) -> jax.Array:
    # Straightforward PyTorch-equivalent reference (softplus threshold = 20).
    xf = x.astype(jnp.float32)
    sp = jnp.where(xf > 20.0, xf, jnp.log1p(jnp.exp(jnp.minimum(xf, 20.0))))
    return (xf * jnp.tanh(sp)).astype(x.dtype)


if __name__ == "__main__":
    key = jax.random.PRNGKey(0)
    k1, k2, k3 = jax.random.split(key, 3)

    # Primary small NCHW input consistent with a conv-style feature map.
    x = jax.random.normal(key, (2, 4, 16, 16), dtype=jnp.float32) * 3.0
    x = x.at[0, 0, 0, 0].set(25.0)    # softplus-threshold branch
    x = x.at[0, 0, 0, 1].set(100.0)   # exp-overflow branch (select discards NaN)
    x = x.at[0, 0, 0, 2].set(-30.0)   # deep negative tail (no cancellation)
    y = mish(x)
    jax.block_until_ready(y)
    assert y.shape == x.shape and y.dtype == x.dtype
    assert jnp.allclose(y, _mish_ref(x), atol=1e-5, rtol=1e-5)

    # Tiny ragged element count (n % 128 != 0): single full-extent 1-D block.
    x_rag_small = jax.random.normal(k1, (3, 5, 7), dtype=jnp.float32) * 3.0
    y_rag_small = mish(x_rag_small)
    jax.block_until_ready(y_rag_small)
    assert jnp.allclose(y_rag_small, _mish_ref(x_rag_small), atol=1e-5, rtol=1e-5)

    # Larger ragged count: multi-step 1-D grid with a masked boundary block.
    x_rag_big = jax.random.normal(k2, (257, 1021), dtype=jnp.float32) * 3.0
    y_rag_big = mish(x_rag_big)
    jax.block_until_ready(y_rag_big)
    assert jnp.allclose(y_rag_big, _mish_ref(x_rag_big), atol=1e-5, rtol=1e-5)

    # Aligned multi-block path: rows=4136 -> 1024-row blocks, 5 grid steps,
    # masked boundary block of 40 rows.
    x_big = jax.random.normal(k3, (2, 2068, 128), dtype=jnp.float32) * 3.0
    y_big = mish(x_big)
    jax.block_until_ready(y_big)
    assert jnp.allclose(y_big, _mish_ref(x_big), atol=1e-5, rtol=1e-5)

    print("KERNEL_OK")
</pallas_src>

<mosaic_0001>
module attributes {stable_mosaic.version = 11 : i64} {
  func.func @_mish_kernel(%arg0: i32, %arg1: memref<16x128xf32, #tpu.memory_space<vmem>>, %arg2: memref<16x128xf32, #tpu.memory_space<vmem>>) attributes {dimension_semantics = [#tpu.dimension_semantics<parallel>], iteration_bounds = array<i64: 1>, scalar_prefetch = 0 : i64, scratch_operands = 0 : i64, tpu.core_type = #tpu.core_type<tc>, window_params = [{transform_indices = @transform_0, window_bounds = array<i64: 16, 128>}, {transform_indices = @transform_1, window_bounds = array<i64: 16, 128>}]} {
    %c0 = arith.constant 0 : index
    %c0_0 = arith.constant 0 : index
    %0 = vector.load %arg1[%c0, %c0_0] : memref<16x128xf32, #tpu.memory_space<vmem>>, vector<16x128xf32>
    %1 = math.exp %0 : vector<16x128xf32>
    %cst = arith.constant 2.000000e+00 : f32
    %2 = vector.broadcast %cst : f32 to vector<16x128xf32>
    %3 = arith.addf %1, %2 : vector<16x128xf32>
    %4 = arith.mulf %1, %3 : vector<16x128xf32>
    %cst_1 = arith.constant 2.000000e+00 : f32
    %5 = vector.broadcast %cst_1 : f32 to vector<16x128xf32>
    %6 = arith.addf %4, %5 : vector<16x128xf32>
    %7 = arith.divf %4, %6 : vector<16x128xf32>
    %cst_2 = arith.constant 2.000000e+01 : f32
    %8 = vector.broadcast %cst_2 : f32 to vector<16x128xf32>
    %9 = arith.cmpf ogt, %0, %8 : vector<16x128xf32>
    %cst_3 = arith.constant 1.000000e+00 : f32
    %10 = vector.broadcast %cst_3 : f32 to vector<16x128xf32>
    %11 = arith.select %9, %10, %7 : vector<16x128xi1>, vector<16x128xf32>
    %12 = arith.mulf %0, %11 : vector<16x128xf32>
    %c0_4 = arith.constant 0 : index
    %c0_5 = arith.constant 0 : index
    %13 = vector.load %arg2[%c0_4, %c0_5] : memref<16x128xf32, #tpu.memory_space<vmem>>, vector<16x128xf32>
    tpu.vector_store %arg2[%c0_4, %c0_5], %12 {strides = array<i32>} : memref<16x128xf32, #tpu.memory_space<vmem>>, vector<16x128xf32>,
    return
  }
  func.func @transform_0(%arg0: i32) -> (i32, i32) {
    %c0_i32 = arith.constant 0 : i32
    %c0_i32_0 = arith.constant 0 : i32
    return %arg0, %c0_i32 : i32, i32
  }
  func.func @transform_1(%arg0: i32) -> (i32, i32) {
    %c0_i32 = arith.constant 0 : i32
    %c0_i32_0 = arith.constant 0 : i32
    return %arg0, %c0_i32 : i32, i32
  }
}

</mosaic_0001>

<llo_original>
// kernel: tpu_custom_call.1
$region0: #{tpu_custom_call.1}
  #allocation0 [shape = 'u32[]', space=smem, size = 0x4, offset = 0x4, fixed_abs, tag = 'smem constant byte address 0x4 - core index']
  #allocation1 [shape = 'u32[144,128]{1,0:T(1,128)}', space=vmem, size = 0x12000, scoped, tag = 'internal scratch']
  %s0 = inlined_call_operand.hbm [shape: f32[16,128], index: 0, kind: input, shape index: {}]
  %s1 = inlined_call_operand.hbm [shape: f32[16,128], index: 1, kind: output, shape index: {}]
  %s2 = sld [smem:[#allocation0]]
  $region18: #{tpu_custom_call.1} parent=0
    _
  %s4 = ssub.s32 1, %s2
  %s5 = scalar_select 0, %s4, %s2
  $region1: #{tpu_custom_call.1} parent=0
    #allocation2 [shape = 'u8[8192]{0}', space=vmem, size = 0x2000, scoped, tag = 'input window, operand 0, single buffered']
    #allocation3 [shape = 's32[1]{0}', space=sflag, size = 0x4, scoped, tag = 'scoped memory for tpu_custom_call.1']
    #allocation4 [shape = 's32[1]{0}', space=sflag, size = 0x4, scoped, tag = 'scoped memory for tpu_custom_call.1']
    #allocation5 [shape = 'u8[8192]{0}', space=vmem, size = 0x2000, scoped, tag = 'output window, operand 0, single buffered']
    %6 = vsyncpa [#allocation3], 0
    %7 = vsyncpa [#allocation4], 0
    // Predicated region
    $region2: #{tpu_custom_call.1} parent=1 // pred_check
      _
    $region3: #{tpu_custom_call.1} parent=1 // pred_check_branch
      %9 = sbr.rel (0) target = $region5
    $region4: #{tpu_custom_call.1} parent=1 // pred_region
      %s11 = ssub.s32 256, 256
      %12 = vsyncadd [#allocation3], %s11
      %s13 = sshll.u32 [#allocation2], 4
      %s14 = int_to_ptr.vmem [resolvable:$true] %s13
      %19 = dma.hbm_to_vmem [thread:$0]  %s0, 256, %s14, [#allocation3], 128, 128, 8
    $region5: #{tpu_custom_call.1} parent=1 // pred_fallthru
      _
    // Predicated region
    $region6: #{tpu_custom_call.1} parent=1 // pred_check
      _
    $region7: #{tpu_custom_call.1} parent=1 // pred_check_branch
      %21 = sbr.rel (0) target = $region9
    $region8: #{tpu_custom_call.1} parent=1 // pred_region
      %22 = dma.done [#allocation3], 256
    $region9: #{tpu_custom_call.1} parent=1 // pred_fallthru
      _
    %v23 = vld [vmem:[#allocation2] sm:$0xff]
    %v24 = vld [vmem:[#allocation2 + $0x8] sm:$0xff]
    %v25 = vmul.f32 %v23, 1.442695
    %v26 = vpow.pop %v25
    %v27 = vmul.f32 %v24, 1.442695
    %v28 = vpow.pop %v27
    %v29 = vadd.f32 %v26, 2.0
    %v30 = vadd.f32 %v28, 2.0
    %v31 = vmul.f32 %v26, %v29
    %v32 = vmul.f32 %v28, %v30
    %v33 = vadd.f32 %v31, 2.0
    %v34 = vadd.f32 %v32, 2.0
    %v35 = vrcp.pop %v33
    %v36 = vmul.f32 %v31, %v35
    %v37 = vrcp.pop %v34
    %v38 = vmul.f32 %v32, %v37
    %vm39 = vcmp.gt.f32.partialorder %v23, 20.0
    %vm40 = vcmp.gt.f32.partialorder %v24, 20.0
    %v41 = vsel %vm39, 1.0, %v36
    %v42 = vsel %vm40, 1.0, %v38
    %v43 = vmul.f32 %v23, %v41
    %v44 = vmul.f32 %v24, %v42
    %45 = vst [vmem:[#allocation5] sm:$0xff] %v43
    %46 = vst [vmem:[#allocation5 + $0x8] sm:$0xff] %v44
    // Predicated region
    $region10: #{tpu_custom_call.1} parent=1 // pred_check
      _
    $region11: #{tpu_custom_call.1} parent=1 // pred_check_branch
      %48 = sbr.rel (0) target = $region13
    $region12: #{tpu_custom_call.1} parent=1 // pred_region
      %s50 = ssub.s32 256, 256
      %51 = vsyncadd [#allocation4], %s50
      %s52 = sshll.u32 [#allocation5], 4
      %s53 = int_to_ptr.vmem [resolvable:$true] %s52
      %58 = dma.vmem_to_hbm [thread:$0]  %s53, 256, %s1, [#allocation4], 128, 128, 8
    $region13: #{tpu_custom_call.1} parent=1 // pred_fallthru
      _
    // Predicated region
    $region14: #{tpu_custom_call.1} parent=1 // pred_check
      _
    $region15: #{tpu_custom_call.1} parent=1 // pred_check_branch
      %60 = sbr.rel (0) target = $region17
    $region16: #{tpu_custom_call.1} parent=1 // pred_region
      %61 = dma.done [#allocation4], 256
    $region17: #{tpu_custom_call.1} parent=1 // pred_fallthru
      _
    %62 = vsyncpa [#allocation3], 1
    %63 = vsyncpa [#allocation4], 1

</llo_original>
